<compile_context>
chip_gen: v6e
topology: v6e:2x2x1
jax: 0.10.0
libtpu: 0.0.40
codegen_flags: <defaults>
</compile_context>

<pallas_src>
import jax
import jax.numpy as jnp
from jax.experimental import pallas as pl
from jax.experimental.pallas import tpu as pltpu

KH = KW = 16          # conv kernel / stride
C_IN = 6
C_OUT = 3
K = C_IN * KH * KW    # 1536 (multiple of 128)


def _round_up(x, m):
    return (x + m - 1) // m * m


def _conv_tanh_kernel(w_ref, a_ref, o_ref):
    # w_ref: (K, C_OUT)   a_ref: (TILE_M, K)   o_ref: (TILE_M, C_OUT)
    # Canonical (M,K)x(K,N) MXU orientation -> no operand transposes.
    acc = jnp.dot(a_ref[...], w_ref[...], preferred_element_type=jnp.float32)
    o_ref[...] = jnp.tanh(acc).astype(o_ref.dtype)


def conv_tanh_pallas(x_nchw, weight, *, tile_m_max=2048,
                     compute_dtype=jnp.bfloat16):
    """x_nchw: (N, 6, H, W) float32, weight: (3, 6, 16, 16) float32."""
    n, c, h, w = x_nchw.shape
    assert c == C_IN
    ho, wo = h // KH, w // KW
    m = n * ho * wo

    # --- layout glue: crop remainder + extract non-overlapping 16x16 patches.
    # Single XLA transpose pass (and the bf16 cast fuses into it); the
    # allow_input_fusion hint below lets XLA avoid materializing `a` in HBM.
    x_crop = x_nchw[:, :, :ho * KH, :wo * KW]
    patches = x_crop.reshape(n, c, ho, KH, wo, KW)
    patches = patches.transpose(0, 2, 4, 1, 3, 5)          # (N, Ho, Wo, C, KH, KW)
    a = patches.reshape(m, K).astype(compute_dtype)        # (M, K) bf16

    # weight flattened and pre-transposed to (K, C_OUT) for canonical matmul
    w_t = weight.reshape(C_OUT, K).T.astype(compute_dtype)

    # --- tile M: >=2 grid steps when possible (v7x megacore), <=2048 rows so
    # the bf16 double-buffer (~12 MiB) fits the scoped-VMEM limit everywhere.
    tile_m_eff = min(tile_m_max, max(128, _round_up(pl.cdiv(m, 2), 128)))
    if tile_m_eff >= m:
        # Block == full array (always legal, regardless of alignment); grid=1.
        tile_m_eff = m
    grid = (pl.cdiv(m, tile_m_eff),)

    out = pl.pallas_call(
        _conv_tanh_kernel,
        out_shape=jax.ShapeDtypeStruct((m, C_OUT), x_nchw.dtype),
        grid_spec=pltpu.PrefetchScalarGridSpec(
            num_scalar_prefetch=0,
            grid=grid,
            in_specs=[
                # weight: constant index_map -> stays resident in VMEM (~9 KiB)
                pl.BlockSpec((K, C_OUT), lambda i: (0, 0)),
                # patch matrix: streamed / double-buffered along M
                pl.BlockSpec((tile_m_eff, K), lambda i: (i, 0)),
            ],
            out_specs=pl.BlockSpec((tile_m_eff, C_OUT), lambda i: (i, 0)),
        ),
        compiler_params=pltpu.CompilerParams(
            dimension_semantics=("parallel",),       # shard grid over TCs (v7x)
            vmem_limit_bytes=32 * 1024 * 1024,       # explicit (v5e default 16 MiB)
            allow_input_fusion=[1],                  # fuse transpose into A operand
        ),
    )(w_t, a)

    # --- layout glue: (M, C_OUT) -> NCHW (N, C_OUT, Ho, Wo); tiny output.
    out = out.reshape(n, ho, wo, C_OUT)
    return out.transpose(0, 3, 1, 2)


if __name__ == "__main__":
    key = jax.random.PRNGKey(0)
    kx, kw = jax.random.split(key)

    # Small shapes consistent with the module's conv: batch=2, 6 channels, 32x32
    x = jax.random.normal(kx, (2, C_IN, 32, 32), dtype=jnp.float32)
    weight = jax.random.normal(kw, (C_OUT, C_IN, KH, KW), dtype=jnp.float32) * 0.05

    y = jax.block_until_ready(conv_tanh_pallas(x, weight))
    assert y.shape == (2, C_OUT, 2, 2)

    # Reference with the same bf16 input rounding (kernel uses bf16 stream +
    # f32 MXU accumulation) -> tight tolerance.
    xb = x.astype(jnp.bfloat16).astype(jnp.float32)
    wb = weight.astype(jnp.bfloat16).astype(jnp.float32)
    ref_bf16 = jnp.tanh(jax.lax.conv_general_dilated(
        xb, wb, window_strides=(KH, KW), padding="VALID",
        dimension_numbers=("NCHW", "OIHW", "NCHW")))
    assert jnp.allclose(y, ref_bf16, atol=2e-3, rtol=2e-3)

    # Full-f32 reference: loose tolerance (bf16 input stream changes numerics
    # slightly, as noted in the perf review).
    ref_f32 = jnp.tanh(jax.lax.conv_general_dilated(
        x, weight, window_strides=(KH, KW), padding="VALID",
        dimension_numbers=("NCHW", "OIHW", "NCHW")))
    assert jnp.allclose(y, ref_f32, atol=6e-2, rtol=6e-2)

    print("KERNEL_OK")
</pallas_src>

<mosaic_0001>
module attributes {stable_mosaic.version = 11 : i64} {
  func.func @_conv_tanh_kernel(%arg0: i32, %arg1: memref<1536x3xbf16, #tpu.memory_space<vmem>>, %arg2: memref<8x1536xbf16, #tpu.memory_space<vmem>>, %arg3: memref<8x3xf32, #tpu.memory_space<vmem>>) attributes {dimension_semantics = [#tpu.dimension_semantics<parallel>], iteration_bounds = array<i64: 1>, scalar_prefetch = 0 : i64, scratch_operands = 0 : i64, tpu.core_type = #tpu.core_type<tc>, window_params = [{pipeline_mode = #tpu.pipeline_mode<synchronous>, transform_indices = @transform_0, window_bounds = array<i64: 1536, 3>}, {transform_indices = @transform_1, window_bounds = array<i64: 8, 1536>}, {transform_indices = @transform_2, window_bounds = array<i64: 8, 3>}]} {
    %c0 = arith.constant 0 : index
    %c0_0 = arith.constant 0 : index
    %0 = vector.load %arg2[%c0, %c0_0] : memref<8x1536xbf16, #tpu.memory_space<vmem>>, vector<8x1536xbf16>
    %c0_1 = arith.constant 0 : index
    %c0_2 = arith.constant 0 : index
    %1 = vector.load %arg1[%c0_1, %c0_2] : memref<1536x3xbf16, #tpu.memory_space<vmem>>, vector<1536x3xbf16>
    %cst = arith.constant dense<0.000000e+00> : vector<8x3xf32>
    %2 = tpu.matmul %0, %1, %cst {dimension_numbers = #tpu.dot_dimension_numbers<[1], [0], [0], [1], [0, 0, 1, 1], [], []>} : vector<8x1536xbf16>, vector<1536x3xbf16>, vector<8x3xf32> -> vector<8x3xf32>
    %3 = math.tanh %2 : vector<8x3xf32>
    %c0_3 = arith.constant 0 : index
    %c0_4 = arith.constant 0 : index
    %4 = vector.load %arg3[%c0_3, %c0_4] : memref<8x3xf32, #tpu.memory_space<vmem>>, vector<8x3xf32>
    tpu.vector_store %arg3[%c0_3, %c0_4], %3 {strides = array<i32>} : memref<8x3xf32, #tpu.memory_space<vmem>>, vector<8x3xf32>,
    return
  }
  func.func @transform_0(%arg0: i32) -> (i32, i32) {
    %c0_i32 = arith.constant 0 : i32
    %c0_i32_0 = arith.constant 0 : i32
    %c0_i32_1 = arith.constant 0 : i32
    return %c0_i32, %c0_i32_0 : i32, i32
  }
  func.func @transform_1(%arg0: i32) -> (i32, i32) {
    %c0_i32 = arith.constant 0 : i32
    %c0_i32_0 = arith.constant 0 : i32
    return %arg0, %c0_i32 : i32, i32
  }
  func.func @transform_2(%arg0: i32) -> (i32, i32) {
    %c0_i32 = arith.constant 0 : i32
    %c0_i32_0 = arith.constant 0 : i32
    return %arg0, %c0_i32 : i32, i32
  }
}

</mosaic_0001>

<llo_original>
// kernel: tpu_custom_call.1
$region0: #{tpu_custom_call.1}
  #allocation0 [shape = 'u32[]', space=smem, size = 0x4, offset = 0x4, fixed_abs, tag = 'smem constant byte address 0x4 - core index']
  #allocation1 [shape = 'u32[144,128]{1,0:T(1,128)}', space=vmem, size = 0x12000, scoped, tag = 'internal scratch']
  %s0 = inlined_call_operand.vmem [shape: bf16[1536,3], index: 0, kind: input, shape index: {}]
  %s1 = inlined_call_operand.vmem [shape: bf16[8,1536], index: 1, kind: input, shape index: {}]
  %s2 = inlined_call_operand.vmem [shape: f32[8,3], index: 2, kind: output, shape index: {}]
  %s3 = sld [smem:[#allocation0]]
  $region18: #{tpu_custom_call.1} parent=0
    _
  %s5 = ssub.s32 1, %s3
  %s6 = scalar_select 0, %s5, %s3
  // Predicated region
  $region2: #{tpu_custom_call.1} parent=0 // pred_check
    _
  $region3: #{tpu_custom_call.1} parent=0 // pred_check_branch
    %8 = sbr.rel (0) target = $region5
  $region4: #{tpu_custom_call.1} parent=0 // pred_region
    _
  $region5: #{tpu_custom_call.1} parent=0 // pred_fallthru
    _
  // Predicated region
  $region6: #{tpu_custom_call.1} parent=0 // pred_check
    _
  $region7: #{tpu_custom_call.1} parent=0 // pred_check_branch
    %10 = sbr.rel (0) target = $region9
  $region8: #{tpu_custom_call.1} parent=0 // pred_region
    _
  $region9: #{tpu_custom_call.1} parent=0 // pred_fallthru
    _
  %v12 = vld [vmem:[%s1] sm:$0xff]
  %v13 = vld [vmem:[%s1 + $0x8] sm:$0xff]
  %v14 = vld [vmem:[%s1 + $0x10] sm:$0xff]
  %v15 = vld [vmem:[%s1 + $0x18] sm:$0xff]
  %v16 = vld [vmem:[%s1 + $0x20] sm:$0xff]
  %v17 = vld [vmem:[%s1 + $0x28] sm:$0xff]
  %v18 = vld [vmem:[%s0] sm:$0xf]
  %v19 = vld [vmem:[%s0 + $0x4] sm:$0xf]
  %v20 = vld [vmem:[%s0 + $0x8] sm:$0xf]
  %v21 = vld [vmem:[%s0 + $0xc] sm:$0xf]
  %v22 = vld [vmem:[%s0 + $0x10] sm:$0xf]
  %v23 = vld [vmem:[%s0 + $0x14] sm:$0xf]
  %v24 = vld [vmem:[%s0 + $0x18] sm:$0xf]
  %v25 = vld [vmem:[%s0 + $0x1c] sm:$0xf]
  %v26 = vld [vmem:[%s0 + $0x20] sm:$0xf]
  %v27 = vld [vmem:[%s0 + $0x24] sm:$0xf]
  %v28 = vld [vmem:[%s0 + $0x28] sm:$0xf]
  %v29 = vld [vmem:[%s0 + $0x2c] sm:$0xf]
  %v30 = vld [vmem:[%s0 + $0x30] sm:$0xf]
  %v31 = vld [vmem:[%s0 + $0x34] sm:$0xf]
  %v32 = vld [vmem:[%s0 + $0x38] sm:$0xf]
  %v33 = vld [vmem:[%s0 + $0x3c] sm:$0xf]
  %v34 = vld [vmem:[%s0 + $0x40] sm:$0xf]
  %v35 = vld [vmem:[%s0 + $0x44] sm:$0xf]
  %v36 = vld [vmem:[%s0 + $0x48] sm:$0xf]
  %v37 = vld [vmem:[%s0 + $0x4c] sm:$0xf]
  %v38 = vld [vmem:[%s0 + $0x50] sm:$0xf]
  %v39 = vld [vmem:[%s0 + $0x54] sm:$0xf]
  %v40 = vld [vmem:[%s0 + $0x58] sm:$0xf]
  %v41 = vld [vmem:[%s0 + $0x5c] sm:$0xf]
  %v42 = vld [vmem:[%s0 + $0x60] sm:$0xf]
  %v43 = vld [vmem:[%s0 + $0x64] sm:$0xf]
  %v44 = vld [vmem:[%s0 + $0x68] sm:$0xf]
  %v45 = vld [vmem:[%s0 + $0x6c] sm:$0xf]
  %v46 = vld [vmem:[%s0 + $0x70] sm:$0xf]
  %v47 = vld [vmem:[%s0 + $0x74] sm:$0xf]
  %v48 = vld [vmem:[%s0 + $0x78] sm:$0xf]
  %v49 = vld [vmem:[%s0 + $0x7c] sm:$0xf]
  %v50 = vld [vmem:[%s0 + $0x80] sm:$0xf]
  %v51 = vld [vmem:[%s0 + $0x84] sm:$0xf]
  %v52 = vld [vmem:[%s0 + $0x88] sm:$0xf]
  %v53 = vld [vmem:[%s0 + $0x8c] sm:$0xf]
  %v54 = vld [vmem:[%s0 + $0x90] sm:$0xf]
  %v55 = vld [vmem:[%s0 + $0x94] sm:$0xf]
  %v56 = vld [vmem:[%s0 + $0x98] sm:$0xf]
  %v57 = vld [vmem:[%s0 + $0x9c] sm:$0xf]
  %v58 = vld [vmem:[%s0 + $0xa0] sm:$0xf]
  %v59 = vld [vmem:[%s0 + $0xa4] sm:$0xf]
  %v60 = vld [vmem:[%s0 + $0xa8] sm:$0xf]
  %v61 = vld [vmem:[%s0 + $0xac] sm:$0xf]
  %v62 = vld [vmem:[%s0 + $0xb0] sm:$0xf]
  %v63 = vld [vmem:[%s0 + $0xb4] sm:$0xf]
  %v64 = vld [vmem:[%s0 + $0xb8] sm:$0xf]
  %v65 = vld [vmem:[%s0 + $0xbc] sm:$0xf]
  %v66 = vld [vmem:[%s0 + $0xc0] sm:$0xf]
  %v67 = vld [vmem:[%s0 + $0xc4] sm:$0xf]
  %v68 = vld [vmem:[%s0 + $0xc8] sm:$0xf]
  %v69 = vld [vmem:[%s0 + $0xcc] sm:$0xf]
  %v70 = vld [vmem:[%s0 + $0xd0] sm:$0xf]
  %v71 = vld [vmem:[%s0 + $0xd4] sm:$0xf]
  %v72 = vld [vmem:[%s0 + $0xd8] sm:$0xf]
  %v73 = vld [vmem:[%s0 + $0xdc] sm:$0xf]
  %v74 = vld [vmem:[%s0 + $0xe0] sm:$0xf]
  %v75 = vld [vmem:[%s0 + $0xe4] sm:$0xf]
  %v76 = vld [vmem:[%s0 + $0xe8] sm:$0xf]
  %v77 = vld [vmem:[%s0 + $0xec] sm:$0xf]
  %v78 = vld [vmem:[%s0 + $0xf0] sm:$0xf]
  %v79 = vld [vmem:[%s0 + $0xf4] sm:$0xf]
  %v80 = vld [vmem:[%s0 + $0xf8] sm:$0xf]
  %v81 = vld [vmem:[%s0 + $0xfc] sm:$0xf]
  %v82 = vld [vmem:[%s0 + $0x100] sm:$0xf]
  %v83 = vld [vmem:[%s0 + $0x104] sm:$0xf]
  %v84 = vld [vmem:[%s0 + $0x108] sm:$0xf]
  %v85 = vld [vmem:[%s0 + $0x10c] sm:$0xf]
  %v86 = vld [vmem:[%s0 + $0x110] sm:$0xf]
  %v87 = vld [vmem:[%s0 + $0x114] sm:$0xf]
  %v88 = vld [vmem:[%s0 + $0x118] sm:$0xf]
  %v89 = vld [vmem:[%s0 + $0x11c] sm:$0xf]
  %v90 = vld [vmem:[%s0 + $0x120] sm:$0xf]
  %v91 = vld [vmem:[%s0 + $0x124] sm:$0xf]
  %v92 = vld [vmem:[%s0 + $0x128] sm:$0xf]
  %v93 = vld [vmem:[%s0 + $0x12c] sm:$0xf]
  %v94 = vld [vmem:[%s0 + $0x130] sm:$0xf]
  %v95 = vld [vmem:[%s0 + $0x134] sm:$0xf]
  %v96 = vld [vmem:[%s0 + $0x138] sm:$0xf]
  %v97 = vld [vmem:[%s0 + $0x13c] sm:$0xf]
  %v98 = vld [vmem:[%s0 + $0x140] sm:$0xf]
  %v99 = vld [vmem:[%s0 + $0x144] sm:$0xf]
  %v100 = vld [vmem:[%s0 + $0x148] sm:$0xf]
  %v101 = vld [vmem:[%s0 + $0x14c] sm:$0xf]
  %v102 = vld [vmem:[%s0 + $0x150] sm:$0xf]
  %v103 = vld [vmem:[%s0 + $0x154] sm:$0xf]
  %v104 = vld [vmem:[%s0 + $0x158] sm:$0xf]
  %v105 = vld [vmem:[%s0 + $0x15c] sm:$0xf]
  %v106 = vld [vmem:[%s0 + $0x160] sm:$0xf]
  %v107 = vld [vmem:[%s0 + $0x164] sm:$0xf]
  %v108 = vld [vmem:[%s0 + $0x168] sm:$0xf]
  %v109 = vld [vmem:[%s0 + $0x16c] sm:$0xf]
  %v110 = vld [vmem:[%s0 + $0x170] sm:$0xf]
  %v111 = vld [vmem:[%s0 + $0x174] sm:$0xf]
  %v112 = vld [vmem:[%s0 + $0x178] sm:$0xf]
  %v113 = vld [vmem:[%s0 + $0x17c] sm:$0xf]
  %v114 = vld [vmem:[%s0 + $0x180] sm:$0xf]
  %v115 = vld [vmem:[%s0 + $0x184] sm:$0xf]
  %v116 = vld [vmem:[%s0 + $0x188] sm:$0xf]
  %v117 = vld [vmem:[%s0 + $0x18c] sm:$0xf]
  %v118 = vld [vmem:[%s0 + $0x190] sm:$0xf]
  %v119 = vld [vmem:[%s0 + $0x194] sm:$0xf]
  %v120 = vld [vmem:[%s0 + $0x198] sm:$0xf]
  %v121 = vld [vmem:[%s0 + $0x19c] sm:$0xf]
  %v122 = vld [vmem:[%s0 + $0x1a0] sm:$0xf]
  %v123 = vld [vmem:[%s0 + $0x1a4] sm:$0xf]
  %v124 = vld [vmem:[%s0 + $0x1a8] sm:$0xf]
  %v125 = vld [vmem:[%s0 + $0x1ac] sm:$0xf]
  %v126 = vld [vmem:[%s0 + $0x1b0] sm:$0xf]
  %v127 = vld [vmem:[%s0 + $0x1b4] sm:$0xf]
  %v128 = vld [vmem:[%s0 + $0x1b8] sm:$0xf]
  %v129 = vld [vmem:[%s0 + $0x1bc] sm:$0xf]
  %v130 = vld [vmem:[%s0 + $0x1c0] sm:$0xf]
  %v131 = vld [vmem:[%s0 + $0x1c4] sm:$0xf]
  %v132 = vld [vmem:[%s0 + $0x1c8] sm:$0xf]
  %v133 = vld [vmem:[%s0 + $0x1cc] sm:$0xf]
  %v134 = vld [vmem:[%s0 + $0x1d0] sm:$0xf]
  %v135 = vld [vmem:[%s0 + $0x1d4] sm:$0xf]
  %v136 = vld [vmem:[%s0 + $0x1d8] sm:$0xf]
  %v137 = vld [vmem:[%s0 + $0x1dc] sm:$0xf]
  %v138 = vld [vmem:[%s0 + $0x1e0] sm:$0xf]
  %v139 = vld [vmem:[%s0 + $0x1e4] sm:$0xf]
  %v140 = vld [vmem:[%s0 + $0x1e8] sm:$0xf]
  %v141 = vld [vmem:[%s0 + $0x1ec] sm:$0xf]
  %v142 = vld [vmem:[%s0 + $0x1f0] sm:$0xf]
  %v143 = vld [vmem:[%s0 + $0x1f4] sm:$0xf]
  %v144 = vld [vmem:[%s0 + $0x1f8] sm:$0xf]
  %v145 = vld [vmem:[%s0 + $0x1fc] sm:$0xf]
  %v146 = vld [vmem:[%s0 + $0x200] sm:$0xf]
  %v147 = vld [vmem:[%s0 + $0x204] sm:$0xf]
  %v148 = vld [vmem:[%s0 + $0x208] sm:$0xf]
  %v149 = vld [vmem:[%s0 + $0x20c] sm:$0xf]
  %v150 = vld [vmem:[%s0 + $0x210] sm:$0xf]
  %v151 = vld [vmem:[%s0 + $0x214] sm:$0xf]
  %v152 = vld [vmem:[%s0 + $0x218] sm:$0xf]
  %v153 = vld [vmem:[%s0 + $0x21c] sm:$0xf]
  %v154 = vld [vmem:[%s0 + $0x220] sm:$0xf]
  %v155 = vld [vmem:[%s0 + $0x224] sm:$0xf]
  %v156 = vld [vmem:[%s0 + $0x228] sm:$0xf]
  %v157 = vld [vmem:[%s0 + $0x22c] sm:$0xf]
  %v158 = vld [vmem:[%s0 + $0x230] sm:$0xf]
  %v159 = vld [vmem:[%s0 + $0x234] sm:$0xf]
  %v160 = vld [vmem:[%s0 + $0x238] sm:$0xf]
  %v161 = vld [vmem:[%s0 + $0x23c] sm:$0xf]
  %v162 = vld [vmem:[%s0 + $0x240] sm:$0xf]
  %v163 = vld [vmem:[%s0 + $0x244] sm:$0xf]
  %v164 = vld [vmem:[%s0 + $0x248] sm:$0xf]
  %v165 = vld [vmem:[%s0 + $0x24c] sm:$0xf]
  %v166 = vld [vmem:[%s0 + $0x250] sm:$0xf]
  %v167 = vld [vmem:[%s0 + $0x254] sm:$0xf]
  %v168 = vld [vmem:[%s0 + $0x258] sm:$0xf]
  %v169 = vld [vmem:[%s0 + $0x25c] sm:$0xf]
  %v170 = vld [vmem:[%s0 + $0x260] sm:$0xf]
  %v171 = vld [vmem:[%s0 + $0x264] sm:$0xf]
  %v172 = vld [vmem:[%s0 + $0x268] sm:$0xf]
  %v173 = vld [vmem:[%s0 + $0x26c] sm:$0xf]
  %v174 = vld [vmem:[%s0 + $0x270] sm:$0xf]
  %v175 = vld [vmem:[%s0 + $0x274] sm:$0xf]
  %v176 = vld [vmem:[%s0 + $0x278] sm:$0xf]
  %v177 = vld [vmem:[%s0 + $0x27c] sm:$0xf]
  %v178 = vld [vmem:[%s0 + $0x280] sm:$0xf]
  %v179 = vld [vmem:[%s0 + $0x284] sm:$0xf]
  %v180 = vld [vmem:[%s0 + $0x288] sm:$0xf]
  %v181 = vld [vmem:[%s0 + $0x28c] sm:$0xf]
  %v182 = vld [vmem:[%s0 + $0x290] sm:$0xf]
  %v183 = vld [vmem:[%s0 + $0x294] sm:$0xf]
  %v184 = vld [vmem:[%s0 + $0x298] sm:$0xf]
  %v185 = vld [vmem:[%s0 + $0x29c] sm:$0xf]
  %v186 = vld [vmem:[%s0 + $0x2a0] sm:$0xf]
  %v187 = vld [vmem:[%s0 + $0x2a4] sm:$0xf]
  %v188 = vld [vmem:[%s0 + $0x2a8] sm:$0xf]
  %v189 = vld [vmem:[%s0 + $0x2ac] sm:$0xf]
  %v190 = vld [vmem:[%s0 + $0x2b0] sm:$0xf]
  %v191 = vld [vmem:[%s0 + $0x2b4] sm:$0xf]
  %v192 = vld [vmem:[%s0 + $0x2b8] sm:$0xf]
  %v193 = vld [vmem:[%s0 + $0x2bc] sm:$0xf]
  %v194 = vld [vmem:[%s0 + $0x2c0] sm:$0xf]
  %v195 = vld [vmem:[%s0 + $0x2c4] sm:$0xf]
  %v196 = vld [vmem:[%s0 + $0x2c8] sm:$0xf]
  %v197 = vld [vmem:[%s0 + $0x2cc] sm:$0xf]
  %v198 = vld [vmem:[%s0 + $0x2d0] sm:$0xf]
  %v199 = vld [vmem:[%s0 + $0x2d4] sm:$0xf]
  %v200 = vld [vmem:[%s0 + $0x2d8] sm:$0xf]
  %v201 = vld [vmem:[%s0 + $0x2dc] sm:$0xf]
  %v202 = vld [vmem:[%s0 + $0x2e0] sm:$0xf]
  %v203 = vld [vmem:[%s0 + $0x2e4] sm:$0xf]
  %v204 = vld [vmem:[%s0 + $0x2e8] sm:$0xf]
  %v205 = vld [vmem:[%s0 + $0x2ec] sm:$0xf]
  %v206 = vld [vmem:[%s0 + $0x2f0] sm:$0xf]
  %v207 = vld [vmem:[%s0 + $0x2f4] sm:$0xf]
  %v208 = vld [vmem:[%s0 + $0x2f8] sm:$0xf]
  %v209 = vld [vmem:[%s0 + $0x2fc] sm:$0xf]
  %v216 = vunpack.c.l.b16 %v12
  %v217 = vunpack.c.h.b16 %v12
  %v218 = vunpack.c.l.b16 %v13
  %v219 = vunpack.c.h.b16 %v13
  %v220 = vunpack.c.l.b16 %v14
  %v221 = vunpack.c.h.b16 %v14
  %v222 = vunpack.c.l.b16 %v15
  %v223 = vunpack.c.h.b16 %v15
  %v224 = vunpack.c.l.b16 %v16
  %v225 = vunpack.c.h.b16 %v16
  %v226 = vunpack.c.l.b16 %v17
  %v227 = vunpack.c.h.b16 %v17
  %v228 = vpack.c.b16 %v216, %v216
  %v229 = vpack.c.b16 %v217, %v217
  %v230 = vpack.c.b16 %v218, %v218
  %v231 = vpack.c.b16 %v219, %v219
  %v232 = vpack.c.b16 %v220, %v220
  %v233 = vpack.c.b16 %v221, %v221
  %v234 = vpack.c.b16 %v222, %v222
  %v235 = vpack.c.b16 %v223, %v223
  %v236 = vpack.c.b16 %v224, %v224
  %v237 = vpack.c.b16 %v225, %v225
  %v238 = vpack.c.b16 %v226, %v226
  %v239 = vpack.c.b16 %v227, %v227
  %v444 = vunpack.c.l.b16 %v18
  %v445 = vunpack.c.l.b16 %v19
  %v446 = vunpack.c.l.b16 %v20
  %v447 = vunpack.c.l.b16 %v21
  %v448 = vunpack.c.l.b16 %v22
  %v449 = vunpack.c.l.b16 %v23
  %v450 = vunpack.c.l.b16 %v24
  %v451 = vunpack.c.l.b16 %v25
  %v452 = vunpack.c.l.b16 %v26
  %v453 = vunpack.c.l.b16 %v27
  %v454 = vunpack.c.l.b16 %v28
  %v455 = vunpack.c.l.b16 %v29
  %v456 = vunpack.c.l.b16 %v30
  %v457 = vunpack.c.l.b16 %v31
  %v458 = vunpack.c.l.b16 %v32
  %v459 = vunpack.c.l.b16 %v33
  %v460 = vunpack.c.l.b16 %v34
  %v461 = vunpack.c.l.b16 %v35
  %v462 = vunpack.c.l.b16 %v36
  %v463 = vunpack.c.l.b16 %v37
  %v464 = vunpack.c.l.b16 %v38
  %v465 = vunpack.c.l.b16 %v39
  %v466 = vunpack.c.l.b16 %v40
  %v467 = vunpack.c.l.b16 %v41
  %v468 = vunpack.c.l.b16 %v42
  %v469 = vunpack.c.l.b16 %v43
  %v470 = vunpack.c.l.b16 %v44
  %v471 = vunpack.c.l.b16 %v45
  %v472 = vunpack.c.l.b16 %v46
  %v473 = vunpack.c.l.b16 %v47
  %v474 = vunpack.c.l.b16 %v48
  %v475 = vunpack.c.l.b16 %v49
  %v476 = vunpack.c.l.b16 %v50
  %v477 = vunpack.c.l.b16 %v51
  %v478 = vunpack.c.l.b16 %v52
  %v479 = vunpack.c.l.b16 %v53
  %v480 = vunpack.c.l.b16 %v54
  %v481 = vunpack.c.l.b16 %v55
  %v482 = vunpack.c.l.b16 %v56
  %v483 = vunpack.c.l.b16 %v57
  %v484 = vunpack.c.l.b16 %v58
  %v485 = vunpack.c.l.b16 %v59
  %v486 = vunpack.c.l.b16 %v60
  %v487 = vunpack.c.l.b16 %v61
  %v488 = vunpack.c.l.b16 %v62
  %v489 = vunpack.c.l.b16 %v63
  %v490 = vunpack.c.l.b16 %v64
  %v491 = vunpack.c.l.b16 %v65
  %v492 = vunpack.c.l.b16 %v66
  %v493 = vunpack.c.l.b16 %v67
  %v494 = vunpack.c.l.b16 %v68
  %v495 = vunpack.c.l.b16 %v69
  %v496 = vunpack.c.l.b16 %v70
  %v497 = vunpack.c.l.b16 %v71
  %v498 = vunpack.c.l.b16 %v72
  %v499 = vunpack.c.l.b16 %v73
  %v500 = vunpack.c.l.b16 %v74
  %v501 = vunpack.c.l.b16 %v75
  %v502 = vunpack.c.l.b16 %v76
  %v503 = vunpack.c.l.b16 %v77
  %v504 = vunpack.c.l.b16 %v78
  %v505 = vunpack.c.l.b16 %v79
  %v506 = vunpack.c.l.b16 %v80
  %v507 = vunpack.c.l.b16 %v81
  %v508 = vunpack.c.l.b16 %v82
  %v509 = vunpack.c.l.b16 %v83
  %v510 = vunpack.c.l.b16 %v84
  %v511 = vunpack.c.l.b16 %v85
  %v512 = vunpack.c.l.b16 %v86
  %v513 = vunpack.c.l.b16 %v87
  %v514 = vunpack.c.l.b16 %v88
  %v515 = vunpack.c.l.b16 %v89
  %v516 = vunpack.c.l.b16 %v90
  %v517 = vunpack.c.l.b16 %v91
  %v518 = vunpack.c.l.b16 %v92
  %v519 = vunpack.c.l.b16 %v93
  %v520 = vunpack.c.l.b16 %v94
  %v521 = vunpack.c.l.b16 %v95
  %v522 = vunpack.c.l.b16 %v96
  %v523 = vunpack.c.l.b16 %v97
  %v524 = vunpack.c.l.b16 %v98
  %v525 = vunpack.c.l.b16 %v99
  %v526 = vunpack.c.l.b16 %v100
  %v527 = vunpack.c.l.b16 %v101
  %v528 = vunpack.c.l.b16 %v102
  %v529 = vunpack.c.l.b16 %v103
  %v530 = vunpack.c.l.b16 %v104
  %v531 = vunpack.c.l.b16 %v105
  %v532 = vunpack.c.l.b16 %v106
  %v533 = vunpack.c.l.b16 %v107
  %v534 = vunpack.c.l.b16 %v108
  %v535 = vunpack.c.l.b16 %v109
  %v536 = vunpack.c.l.b16 %v110
  %v537 = vunpack.c.l.b16 %v111
  %v538 = vunpack.c.l.b16 %v112
  %v539 = vunpack.c.l.b16 %v113
  %v540 = vunpack.c.l.b16 %v114
  %v541 = vunpack.c.l.b16 %v115
  %v542 = vunpack.c.l.b16 %v116
  %v543 = vunpack.c.l.b16 %v117
  %v544 = vunpack.c.l.b16 %v118
  %v545 = vunpack.c.l.b16 %v119
  %v546 = vunpack.c.l.b16 %v120
  %v547 = vunpack.c.l.b16 %v121
  %v548 = vunpack.c.l.b16 %v122
  %v549 = vunpack.c.l.b16 %v123
  %v550 = vunpack.c.l.b16 %v124
  %v551 = vunpack.c.l.b16 %v125
  %v552 = vunpack.c.l.b16 %v126
  %v553 = vunpack.c.l.b16 %v127
  %v554 = vunpack.c.l.b16 %v128
  %v555 = vunpack.c.l.b16 %v129
  %v556 = vunpack.c.l.b16 %v130
  %v557 = vunpack.c.l.b16 %v131
  %v558 = vunpack.c.l.b16 %v132
  %v559 = vunpack.c.l.b16 %v133
  %v560 = vunpack.c.l.b16 %v134
  %v561 = vunpack.c.l.b16 %v135
  %v562 = vunpack.c.l.b16 %v136
  %v563 = vunpack.c.l.b16 %v137
  %v564 = vunpack.c.l.b16 %v138
  %v565 = vunpack.c.l.b16 %v139
  %v566 = vunpack.c.l.b16 %v140
  %v567 = vunpack.c.l.b16 %v141
  %v568 = vunpack.c.l.b16 %v142
  %v569 = vunpack.c.l.b16 %v143
  %v570 = vunpack.c.l.b16 %v144
  %v571 = vunpack.c.l.b16 %v145
  %v572 = vunpack.c.l.b16 %v146
  %v573 = vunpack.c.l.b16 %v147
  %v574 = vunpack.c.l.b16 %v148
  %v575 = vunpack.c.l.b16 %v149
  %v576 = vunpack.c.l.b16 %v150
  %v577 = vunpack.c.l.b16 %v151
  %v578 = vunpack.c.l.b16 %v152
  %v579 = vunpack.c.l.b16 %v153
  %v580 = vunpack.c.l.b16 %v154
  %v581 = vunpack.c.l.b16 %v155
  %v582 = vunpack.c.l.b16 %v156
  %v583 = vunpack.c.l.b16 %v157
  %v584 = vunpack.c.l.b16 %v158
  %v585 = vunpack.c.l.b16 %v159
  %v586 = vunpack.c.l.b16 %v160
  %v587 = vunpack.c.l.b16 %v161
  %v588 = vunpack.c.l.b16 %v162
  %v589 = vunpack.c.l.b16 %v163
  %v590 = vunpack.c.l.b16 %v164
  %v591 = vunpack.c.l.b16 %v165
  %v592 = vunpack.c.l.b16 %v166
  %v593 = vunpack.c.l.b16 %v167
  %v594 = vunpack.c.l.b16 %v168
  %v595 = vunpack.c.l.b16 %v169
  %v596 = vunpack.c.l.b16 %v170
  %v597 = vunpack.c.l.b16 %v171
  %v598 = vunpack.c.l.b16 %v172
  %v599 = vunpack.c.l.b16 %v173
  %v600 = vunpack.c.l.b16 %v174
  %v601 = vunpack.c.l.b16 %v175
  %v602 = vunpack.c.l.b16 %v176
  %v603 = vunpack.c.l.b16 %v177
  %v604 = vunpack.c.l.b16 %v178
  %v605 = vunpack.c.l.b16 %v179
  %v606 = vunpack.c.l.b16 %v180
  %v607 = vunpack.c.l.b16 %v181
  %v608 = vunpack.c.l.b16 %v182
  %v609 = vunpack.c.l.b16 %v183
  %v610 = vunpack.c.l.b16 %v184
  %v611 = vunpack.c.l.b16 %v185
  %v612 = vunpack.c.l.b16 %v186
  %v613 = vunpack.c.l.b16 %v187
  %v614 = vunpack.c.l.b16 %v188
  %v615 = vunpack.c.l.b16 %v189
  %v616 = vunpack.c.l.b16 %v190
  %v617 = vunpack.c.l.b16 %v191
  %v618 = vunpack.c.l.b16 %v192
  %v619 = vunpack.c.l.b16 %v193
  %v620 = vunpack.c.l.b16 %v194
  %v621 = vunpack.c.l.b16 %v195
  %v622 = vunpack.c.l.b16 %v196
  %v623 = vunpack.c.l.b16 %v197
  %v624 = vunpack.c.l.b16 %v198
  %v625 = vunpack.c.l.b16 %v199
  %v626 = vunpack.c.l.b16 %v200
  %v627 = vunpack.c.l.b16 %v201
  %v628 = vunpack.c.l.b16 %v202
  %v629 = vunpack.c.l.b16 %v203
  %v630 = vunpack.c.l.b16 %v204
  %v631 = vunpack.c.l.b16 %v205
  %v632 = vunpack.c.l.b16 %v206
  %v633 = vunpack.c.l.b16 %v207
  %v634 = vunpack.c.l.b16 %v208
  %v635 = vunpack.c.l.b16 %v209
  %v636 = vpack.c.b16 %v445, %v444
  %v637 = vpack.c.b16 %v447, %v446
  %v638 = vpack.c.b16 %v449, %v448
  %v639 = vpack.c.b16 %v451, %v450
  %v640 = vpack.c.b16 %v453, %v452
  %v641 = vpack.c.b16 %v455, %v454
  %v642 = vpack.c.b16 %v457, %v456
  %v643 = vpack.c.b16 %v459, %v458
  %v644 = vpack.c.b16 %v461, %v460
  %v645 = vpack.c.b16 %v463, %v462
  %v646 = vpack.c.b16 %v465, %v464
  %v647 = vpack.c.b16 %v467, %v466
  %v648 = vpack.c.b16 %v469, %v468
  %v649 = vpack.c.b16 %v471, %v470
  %v650 = vpack.c.b16 %v473, %v472
  %v651 = vpack.c.b16 %v475, %v474
  %v652 = vpack.c.b16 %v477, %v476
  %v653 = vpack.c.b16 %v479, %v478
  %v654 = vpack.c.b16 %v481, %v480
  %v655 = vpack.c.b16 %v483, %v482
  %v656 = vpack.c.b16 %v485, %v484
  %v657 = vpack.c.b16 %v487, %v486
  %v658 = vpack.c.b16 %v489, %v488
  %v659 = vpack.c.b16 %v491, %v490
  %v660 = vpack.c.b16 %v493, %v492
  %v661 = vpack.c.b16 %v495, %v494
  %v662 = vpack.c.b16 %v497, %v496
  %v663 = vpack.c.b16 %v499, %v498
  %v664 = vpack.c.b16 %v501, %v500
  %v665 = vpack.c.b16 %v503, %v502
  %v666 = vpack.c.b16 %v505, %v504
  %v667 = vpack.c.b16 %v507, %v506
  %v668 = vpack.c.b16 %v509, %v508
  %v669 = vpack.c.b16 %v511, %v510
  %v670 = vpack.c.b16 %v513, %v512
  %v671 = vpack.c.b16 %v515, %v514
  %v672 = vpack.c.b16 %v517, %v516
  %v673 = vpack.c.b16 %v519, %v518
  %v674 = vpack.c.b16 %v521, %v520
  %v675 = vpack.c.b16 %v523, %v522
  %v676 = vpack.c.b16 %v525, %v524
  %v677 = vpack.c.b16 %v527, %v526
  %v678 = vpack.c.b16 %v529, %v528
  %v679 = vpack.c.b16 %v531, %v530
  %v680 = vpack.c.b16 %v533, %v532
  %v681 = vpack.c.b16 %v535, %v534
  %v682 = vpack.c.b16 %v537, %v536
  %v683 = vpack.c.b16 %v539, %v538
  %v684 = vpack.c.b16 %v541, %v540
  %v685 = vpack.c.b16 %v543, %v542
  %v686 = vpack.c.b16 %v545, %v544
  %v687 = vpack.c.b16 %v547, %v546
  %v688 = vpack.c.b16 %v549, %v548
  %v689 = vpack.c.b16 %v551, %v550
  %v690 = vpack.c.b16 %v553, %v552
  %v691 = vpack.c.b16 %v555, %v554
  %v692 = vpack.c.b16 %v557, %v556
  %v693 = vpack.c.b16 %v559, %v558
  %v694 = vpack.c.b16 %v561, %v560
  %v695 = vpack.c.b16 %v563, %v562
  %v696 = vpack.c.b16 %v565, %v564
  %v697 = vpack.c.b16 %v567, %v566
  %v698 = vpack.c.b16 %v569, %v568
  %v699 = vpack.c.b16 %v571, %v570
  %v700 = vpack.c.b16 %v573, %v572
  %v701 = vpack.c.b16 %v575, %v574
  %v702 = vpack.c.b16 %v577, %v576
  %v703 = vpack.c.b16 %v579, %v578
  %v704 = vpack.c.b16 %v581, %v580
  %v705 = vpack.c.b16 %v583, %v582
  %v706 = vpack.c.b16 %v585, %v584
  %v707 = vpack.c.b16 %v587, %v586
  %v708 = vpack.c.b16 %v589, %v588
  %v709 = vpack.c.b16 %v591, %v590
  %v710 = vpack.c.b16 %v593, %v592
  %v711 = vpack.c.b16 %v595, %v594
  %v712 = vpack.c.b16 %v597, %v596
  %v713 = vpack.c.b16 %v599, %v598
  %v714 = vpack.c.b16 %v601, %v600
  %v715 = vpack.c.b16 %v603, %v602
  %v716 = vpack.c.b16 %v605, %v604
  %v717 = vpack.c.b16 %v607, %v606
  %v718 = vpack.c.b16 %v609, %v608
  %v719 = vpack.c.b16 %v611, %v610
  %v720 = vpack.c.b16 %v613, %v612
  %v721 = vpack.c.b16 %v615, %v614
  %v722 = vpack.c.b16 %v617, %v616
  %v723 = vpack.c.b16 %v619, %v618
  %v724 = vpack.c.b16 %v621, %v620
  %v725 = vpack.c.b16 %v623, %v622
  %v726 = vpack.c.b16 %v625, %v624
  %v727 = vpack.c.b16 %v627, %v626
  %v728 = vpack.c.b16 %v629, %v628
  %v729 = vpack.c.b16 %v631, %v630
  %v730 = vpack.c.b16 %v633, %v632
  %v731 = vpack.c.b16 %v635, %v634
  %828 = vmatprep.subr.bf16.mxu0 0
  %829 = vmatpush1.bf16.msra.mxu0 %v643
  %830 = vmatprep.subr.bf16.mxu0 0
  %831 = vmatpush1.bf16.msra.mxu0 %v642
  %832 = vmatprep.subr.bf16.mxu0 0
  %833 = vmatpush1.bf16.msra.mxu0 %v641
  %834 = vmatprep.subr.bf16.mxu0 0
  %835 = vmatpush1.bf16.msra.mxu0 %v640
  %836 = vmatprep.subr.bf16.mxu0 0
  %837 = vmatpush1.bf16.msra.mxu0 %v639
  %838 = vmatprep.subr.bf16.mxu0 0
  %839 = vmatpush1.bf16.msra.mxu0 %v638
  %840 = vmatprep.subr.bf16.mxu0 0
  %841 = vmatpush1.bf16.msra.mxu0 %v637
  %842 = vmatprep.subr.bf16.mxu0 0
  %843 = vmatpush1.bf16.msra.mxu0 %v636
  %844 = vmatprep.subr.bf16.mxu0 0
  %845 = vmatpush2.bf16.msra.mxu0 %v651
  %846 = vmatprep.subr.bf16.mxu0 0
  %847 = vmatpush2.bf16.msra.mxu0 %v650
  %848 = vmatprep.subr.bf16.mxu0 0
  %849 = vmatpush2.bf16.msra.mxu0 %v649
  %850 = vmatprep.subr.bf16.mxu0 0
  %851 = vmatpush2.bf16.msra.mxu0 %v648
  %852 = vmatprep.subr.bf16.mxu0 0
  %853 = vmatpush2.bf16.msra.mxu0 %v647
  %854 = vmatprep.subr.bf16.mxu0 0
  %855 = vmatpush2.bf16.msra.mxu0 %v646
  %856 = vmatprep.subr.bf16.mxu0 0
  %857 = vmatpush2.bf16.msra.mxu0 %v645
  %858 = vmatprep.subr.bf16.mxu0 0
  %859 = vmatpush2.bf16.msra.mxu0 %v644
  %860 = vmatprep.mubr.bf16.mxu0 %v229
  %861 = vmatmul.mubr.bf16.gmra.mxu0 %v228
  %v862 = vpop.f32.mrf.mxu0
  %v863 = vadd.f32 0.0, %v862
  %v864 = vpop.f32.mrf.mxu0
  %v865 = vpop.f32.mrf.mxu0
  %v866 = vpop.f32.mrf.mxu0
  %867 = vdwg.mxu0
  %868 = vmatprep.subr.bf16.mxu0 0
  %869 = vmatpush1.bf16.msra.mxu0 %v659
  %870 = vmatprep.subr.bf16.mxu0 0
  %871 = vmatpush1.bf16.msra.mxu0 %v658
  %872 = vmatprep.subr.bf16.mxu0 0
  %873 = vmatpush1.bf16.msra.mxu0 %v657
  %874 = vmatprep.subr.bf16.mxu0 0
  %875 = vmatpush1.bf16.msra.mxu0 %v656
  %876 = vmatprep.subr.bf16.mxu0 0
  %877 = vmatpush1.bf16.msra.mxu0 %v655
  %878 = vmatprep.subr.bf16.mxu0 0
  %879 = vmatpush1.bf16.msra.mxu0 %v654
  %880 = vmatprep.subr.bf16.mxu0 0
  %881 = vmatpush1.bf16.msra.mxu0 %v653
  %882 = vmatprep.subr.bf16.mxu0 0
  %883 = vmatpush1.bf16.msra.mxu0 %v652
  %884 = vmatprep.subr.bf16.mxu0 0
  %885 = vmatpush2.bf16.msra.mxu0 %v667
  %886 = vmatprep.subr.bf16.mxu0 0
  %887 = vmatpush2.bf16.msra.mxu0 %v666
  %888 = vmatprep.subr.bf16.mxu0 0
  %889 = vmatpush2.bf16.msra.mxu0 %v665
  %890 = vmatprep.subr.bf16.mxu0 0
  %891 = vmatpush2.bf16.msra.mxu0 %v664
  %892 = vmatprep.subr.bf16.mxu0 0
  %893 = vmatpush2.bf16.msra.mxu0 %v663
  %894 = vmatprep.subr.bf16.mxu0 0
  %895 = vmatpush2.bf16.msra.mxu0 %v662
  %896 = vmatprep.subr.bf16.mxu0 0
  %897 = vmatpush2.bf16.msra.mxu0 %v661
  %898 = vmatprep.subr.bf16.mxu0 0
  %899 = vmatpush2.bf16.msra.mxu0 %v660
  %900 = vmatprep.mubr.bf16.mxu0 %v231
  %901 = vmatmul.mubr.bf16.gmra.mxu0 %v230
  %v902 = vpop.f32.mrf.mxu0
  %v903 = vadd.f32 %v863, %v902
  %v904 = vpop.f32.mrf.mxu0
  %v905 = vpop.f32.mrf.mxu0
  %v906 = vpop.f32.mrf.mxu0
  %907 = vdwg.mxu0
  %908 = vmatprep.subr.bf16.mxu0 0
  %909 = vmatpush1.bf16.msra.mxu0 %v675
  %910 = vmatprep.subr.bf16.mxu0 0
  %911 = vmatpush1.bf16.msra.mxu0 %v674
  %912 = vmatprep.subr.bf16.mxu0 0
  %913 = vmatpush1.bf16.msra.mxu0 %v673
  %914 = vmatprep.subr.bf16.mxu0 0
  %915 = vmatpush1.bf16.msra.mxu0 %v672
  %916 = vmatprep.subr.bf16.mxu0 0
  %917 = vmatpush1.bf16.msra.mxu0 %v671
  %918 = vmatprep.subr.bf16.mxu0 0
  %919 = vmatpush1.bf16.msra.mxu0 %v670
  %920 = vmatprep.subr.bf16.mxu0 0
  %921 = vmatpush1.bf16.msra.mxu0 %v669
  %922 = vmatprep.subr.bf16.mxu0 0
  %923 = vmatpush1.bf16.msra.mxu0 %v668
  %924 = vmatprep.subr.bf16.mxu0 0
  %925 = vmatpush2.bf16.msra.mxu0 %v683
  %926 = vmatprep.subr.bf16.mxu0 0
  %927 = vmatpush2.bf16.msra.mxu0 %v682
  %928 = vmatprep.subr.bf16.mxu0 0
  %929 = vmatpush2.bf16.msra.mxu0 %v681
  %930 = vmatprep.subr.bf16.mxu0 0
  %931 = vmatpush2.bf16.msra.mxu0 %v680
  %932 = vmatprep.subr.bf16.mxu0 0
  %933 = vmatpush2.bf16.msra.mxu0 %v679
  %934 = vmatprep.subr.bf16.mxu0 0
  %935 = vmatpush2.bf16.msra.mxu0 %v678
  %936 = vmatprep.subr.bf16.mxu0 0
  %937 = vmatpush2.bf16.msra.mxu0 %v677
  %938 = vmatprep.subr.bf16.mxu0 0
  %939 = vmatpush2.bf16.msra.mxu0 %v676
  %940 = vmatprep.mubr.bf16.mxu0 %v233
  %941 = vmatmul.mubr.bf16.gmra.mxu0 %v232
  %v942 = vpop.f32.mrf.mxu0
  %v943 = vadd.f32 %v903, %v942
  %v944 = vpop.f32.mrf.mxu0
  %v945 = vpop.f32.mrf.mxu0
  %v946 = vpop.f32.mrf.mxu0
  %947 = vdwg.mxu0
  %948 = vmatprep.subr.bf16.mxu0 0
  %949 = vmatpush1.bf16.msra.mxu0 %v691
  %950 = vmatprep.subr.bf16.mxu0 0
  %951 = vmatpush1.bf16.msra.mxu0 %v690
  %952 = vmatprep.subr.bf16.mxu0 0
  %953 = vmatpush1.bf16.msra.mxu0 %v689
  %954 = vmatprep.subr.bf16.mxu0 0
  %955 = vmatpush1.bf16.msra.mxu0 %v688
  %956 = vmatprep.subr.bf16.mxu0 0
  %957 = vmatpush1.bf16.msra.mxu0 %v687
  %958 = vmatprep.subr.bf16.mxu0 0
  %959 = vmatpush1.bf16.msra.mxu0 %v686
  %960 = vmatprep.subr.bf16.mxu0 0
  %961 = vmatpush1.bf16.msra.mxu0 %v685
  %962 = vmatprep.subr.bf16.mxu0 0
  %963 = vmatpush1.bf16.msra.mxu0 %v684
  %964 = vmatprep.subr.bf16.mxu0 0
  %965 = vmatpush2.bf16.msra.mxu0 %v699
  %966 = vmatprep.subr.bf16.mxu0 0
  %967 = vmatpush2.bf16.msra.mxu0 %v698
  %968 = vmatprep.subr.bf16.mxu0 0
  %969 = vmatpush2.bf16.msra.mxu0 %v697
  %970 = vmatprep.subr.bf16.mxu0 0
  %971 = vmatpush2.bf16.msra.mxu0 %v696
  %972 = vmatprep.subr.bf16.mxu0 0
  %973 = vmatpush2.bf16.msra.mxu0 %v695
  %974 = vmatprep.subr.bf16.mxu0 0
  %975 = vmatpush2.bf16.msra.mxu0 %v694
  %976 = vmatprep.subr.bf16.mxu0 0
  %977 = vmatpush2.bf16.msra.mxu0 %v693
  %978 = vmatprep.subr.bf16.mxu0 0
  %979 = vmatpush2.bf16.msra.mxu0 %v692
  %980 = vmatprep.mubr.bf16.mxu0 %v235
  %981 = vmatmul.mubr.bf16.gmra.mxu0 %v234
  %v982 = vpop.f32.mrf.mxu0
  %v983 = vadd.f32 %v943, %v982
  %v984 = vpop.f32.mrf.mxu0
  %v985 = vpop.f32.mrf.mxu0
  %v986 = vpop.f32.mrf.mxu0
  %987 = vdwg.mxu0
  %988 = vmatprep.subr.bf16.mxu0 0
  %989 = vmatpush1.bf16.msra.mxu0 %v707
  %990 = vmatprep.subr.bf16.mxu0 0
  %991 = vmatpush1.bf16.msra.mxu0 %v706
  %992 = vmatprep.subr.bf16.mxu0 0
  %993 = vmatpush1.bf16.msra.mxu0 %v705
  %994 = vmatprep.subr.bf16.mxu0 0
  %995 = vmatpush1.bf16.msra.mxu0 %v704
  %996 = vmatprep.subr.bf16.mxu0 0
  %997 = vmatpush1.bf16.msra.mxu0 %v703
  %998 = vmatprep.subr.bf16.mxu0 0
  %999 = vmatpush1.bf16.msra.mxu0 %v702
  %1000 = vmatprep.subr.bf16.mxu0 0
  %1001 = vmatpush1.bf16.msra.mxu0 %v701
  %1002 = vmatprep.subr.bf16.mxu0 0
  %1003 = vmatpush1.bf16.msra.mxu0 %v700
  %1004 = vmatprep.subr.bf16.mxu0 0
  %1005 = vmatpush2.bf16.msra.mxu0 %v715
  %1006 = vmatprep.subr.bf16.mxu0 0
  %1007 = vmatpush2.bf16.msra.mxu0 %v714
  %1008 = vmatprep.subr.bf16.mxu0 0
  %1009 = vmatpush2.bf16.msra.mxu0 %v713
  %1010 = vmatprep.subr.bf16.mxu0 0
  %1011 = vmatpush2.bf16.msra.mxu0 %v712
  %1012 = vmatprep.subr.bf16.mxu0 0
  %1013 = vmatpush2.bf16.msra.mxu0 %v711
  %1014 = vmatprep.subr.bf16.mxu0 0
  %1015 = vmatpush2.bf16.msra.mxu0 %v710
  %1016 = vmatprep.subr.bf16.mxu0 0
  %1017 = vmatpush2.bf16.msra.mxu0 %v709
  %1018 = vmatprep.subr.bf16.mxu0 0
  %1019 = vmatpush2.bf16.msra.mxu0 %v708
  %1020 = vmatprep.mubr.bf16.mxu0 %v237
  %1021 = vmatmul.mubr.bf16.gmra.mxu0 %v236
  %v1022 = vpop.f32.mrf.mxu0
  %v1023 = vadd.f32 %v983, %v1022
  %v1024 = vpop.f32.mrf.mxu0
  %v1025 = vpop.f32.mrf.mxu0
  %v1026 = vpop.f32.mrf.mxu0
  %1027 = vdwg.mxu0
  %1028 = vmatprep.subr.bf16.mxu0 0
  %1029 = vmatpush1.bf16.msra.mxu0 %v723
  %1030 = vmatprep.subr.bf16.mxu0 0
  %1031 = vmatpush1.bf16.msra.mxu0 %v722
  %1032 = vmatprep.subr.bf16.mxu0 0
  %1033 = vmatpush1.bf16.msra.mxu0 %v721
  %1034 = vmatprep.subr.bf16.mxu0 0
  %1035 = vmatpush1.bf16.msra.mxu0 %v720
  %1036 = vmatprep.subr.bf16.mxu0 0
  %1037 = vmatpush1.bf16.msra.mxu0 %v719
  %1038 = vmatprep.subr.bf16.mxu0 0
  %1039 = vmatpush1.bf16.msra.mxu0 %v718
  %1040 = vmatprep.subr.bf16.mxu0 0
  %1041 = vmatpush1.bf16.msra.mxu0 %v717
  %1042 = vmatprep.subr.bf16.mxu0 0
  %1043 = vmatpush1.bf16.msra.mxu0 %v716
  %1044 = vmatprep.subr.bf16.mxu0 0
  %1045 = vmatpush2.bf16.msra.mxu0 %v731
  %1046 = vmatprep.subr.bf16.mxu0 0
  %1047 = vmatpush2.bf16.msra.mxu0 %v730
  %1048 = vmatprep.subr.bf16.mxu0 0
  %1049 = vmatpush2.bf16.msra.mxu0 %v729
  %1050 = vmatprep.subr.bf16.mxu0 0
  %1051 = vmatpush2.bf16.msra.mxu0 %v728
  %1052 = vmatprep.subr.bf16.mxu0 0
  %1053 = vmatpush2.bf16.msra.mxu0 %v727
  %1054 = vmatprep.subr.bf16.mxu0 0
  %1055 = vmatpush2.bf16.msra.mxu0 %v726
  %1056 = vmatprep.subr.bf16.mxu0 0
  %1057 = vmatpush2.bf16.msra.mxu0 %v725
  %1058 = vmatprep.subr.bf16.mxu0 0
  %1059 = vmatpush2.bf16.msra.mxu0 %v724
  %1060 = vmatprep.mubr.bf16.mxu0 %v239
  %1061 = vmatmul.mubr.bf16.gmra.mxu0 %v238
  %v1062 = vpop.f32.mrf.mxu0
  %v1063 = vadd.f32 %v1023, %v1062
  %v1064 = vpop.f32.mrf.mxu0
  %v1065 = vpop.f32.mrf.mxu0
  %v1066 = vpop.f32.mrf.mxu0
  %1067 = vdwg.mxu0
  %v1068 = vtanh.pop %v1063
  %vm1069 = vcmask 23552
  %1070 = vst.msk [vmem:[%s2] sm:$0xff] %vm1069, %v1068
  // Predicated region
  $region10: #{tpu_custom_call.1} parent=0 // pred_check
    _
  $region11: #{tpu_custom_call.1} parent=0 // pred_check_branch
    %1072 = sbr.rel (0) target = $region13
  $region12: #{tpu_custom_call.1} parent=0 // pred_region
    _
  $region13: #{tpu_custom_call.1} parent=0 // pred_fallthru
    _
  // Predicated region
  $region14: #{tpu_custom_call.1} parent=0 // pred_check
    _
  $region15: #{tpu_custom_call.1} parent=0 // pred_check_branch
    %1074 = sbr.rel (0) target = $region17
  $region16: #{tpu_custom_call.1} parent=0 // pred_region
    _
  $region17: #{tpu_custom_call.1} parent=0 // pred_fallthru
    _

</llo_original>
